<compile_context>
chip_gen: v7x
topology: tpu7x:2x2x1
jax: 0.10.0
libtpu: 0.0.40
codegen_flags: <defaults>
</compile_context>

<pallas_src>
import functools
import math

import jax
import jax.numpy as jnp
from jax.experimental import pallas as pl
from jax.experimental.pallas import tpu as pltpu

_BN_EPS = 1e-5
_EXPANSION = 4   # Bottle2neck.expansion

_MAX_TM = 1024   # rows of the patches matrix per grid step (weight reuse, v6e)
_MAX_TK = 2048   # contraction-dim tile
_MAX_TN = 512    # output-channel tile (keeps weight/acc blocks small on v7x)


# ---------------------------------------------------------------------------
# Tiling helpers.
# ---------------------------------------------------------------------------
def _round_up(x, m):
    return -(-x // m) * m


def _m_tiling(m):
    # bf16 packs (16, 128): M tiles are multiples of 16 (no masked sublanes).
    m_pad = _round_up(max(m, 1), 16)
    n_m = -(-m_pad // _MAX_TM)
    if n_m == 1 and m_pad >= 1024:
        n_m = 2          # >= 2 M tiles once there is real work (v7x 2nd TC)
    tm = _round_up(-(-m_pad // n_m), 16)
    return tm * n_m, tm, n_m


def _k_tiling(k):
    k_pad = _round_up(max(k, 1), 128)
    n_k = -(-k_pad // _MAX_TK)
    tk = _round_up(-(-k_pad // n_k), 128)
    return tk * n_k, tk, n_k


def _n_tiling(cout):
    n_pad = _round_up(max(cout, 1), 128)
    n_n = -(-n_pad // _MAX_TN)
    tn = _round_up(-(-n_pad // n_n), 128)
    return tn * n_n, tn, n_n


def _vmem_limit_bytes():
    # Generation-aware scoped-VMEM budget: 75% of physical, capped at 100 MiB.
    # v7x (64 MiB physical) -> ~48 MiB, v5e/v6e (128 MiB) -> 96 MiB.
    try:
        cap = int(pltpu.get_tpu_info().vmem_capacity_bytes)
        if cap <= 0:
            return None
        return min((cap * 3) // 4, 100 * 1024 * 1024)
    except Exception:
        return None


_VMEM_LIMIT = _vmem_limit_bytes()


def _compiler_params(dimension_semantics):
    return pltpu.CompilerParams(dimension_semantics=dimension_semantics,
                                vmem_limit_bytes=_VMEM_LIMIT)


# ---------------------------------------------------------------------------
# Pallas kernels.
# ---------------------------------------------------------------------------
def _matmul_kernel(x_ref, w_ref, s_ref, b_ref, *rest, relu, has_res):
    """One (tm, tk)x(tk, tn) MXU step; BN / residual / ReLU epilogue on last K.

    Every caller uses a 3-D grid with the K reduction as the innermost axis 2.
    """
    if has_res:
        r_ref, o_ref, acc_ref = rest
    else:
        o_ref, acc_ref = rest

    @pl.when(pl.program_id(2) == 0)
    def _():
        acc_ref[...] = jnp.zeros_like(acc_ref)

    acc_ref[...] += jnp.dot(x_ref[...], w_ref[...],
                            preferred_element_type=jnp.float32)

    @pl.when(pl.program_id(2) == pl.num_programs(2) - 1)
    def _():
        y = acc_ref[...] * s_ref[...] + b_ref[...]
        if has_res:
            y = y + r_ref[...].astype(jnp.float32)
        if relu:
            y = jnp.maximum(y, 0.0)
        o_ref[...] = y.astype(o_ref.dtype)


def _pool_max_kernel(p_ref, o_ref):
    o_ref[...] = jnp.max(p_ref[...], axis=0)


def _pool_avg_kernel(p_ref, o_ref, *, inv):
    o_ref[...] = (jnp.sum(p_ref[...].astype(jnp.float32), axis=0) * inv
                  ).astype(o_ref.dtype)


# ---------------------------------------------------------------------------
# Glue: shifted-slice patch construction (pure data movement, no reductions).
# TODO(synk): for large images, move the k*k tap accumulation in-kernel
# (halo tiles / tap grid axis) instead of building patches in HBM.
# ---------------------------------------------------------------------------
def _shifted_slices(x, k, stride, pad, pad_value):
    n, h, w, c = x.shape
    if pad > 0:
        x = jnp.pad(x, ((0, 0), (pad, pad), (pad, pad), (0, 0)),
                    constant_values=pad_value)
    ho = (h + 2 * pad - k) // stride + 1
    wo = (w + 2 * pad - k) // stride + 1
    sl = [x[:, i:i + stride * (ho - 1) + 1:stride,
            j:j + stride * (wo - 1) + 1:stride, :]
          for i in range(k) for j in range(k)]
    return sl, (n, ho, wo)


# ---------------------------------------------------------------------------
# Pallas-backed ops.
# ---------------------------------------------------------------------------
def conv_bn_act(x, p, *, stride=1, pad=0, relu, residual=None):
    """conv2d (no bias) + folded BatchNorm + optional fused residual/ReLU, NHWC."""
    k, cout = p['k'], p['cout']
    if k == 1 and stride == 1 and pad == 0:
        n, ho, wo, cin = x.shape
        patches = x.reshape(n * ho * wo, cin)
    else:
        sl, (n, ho, wo) = _shifted_slices(x, k, stride, pad, 0.0)
        patches = jnp.concatenate(sl, axis=-1).reshape(n * ho * wo, -1)

    m = n * ho * wo
    kdim = patches.shape[1]
    k_tot = p['tk'] * p['n_k']
    tn, n_n, n_tot = p['tn'], p['n_n'], p['n_tot']
    m_pad, tm, n_m = _m_tiling(m)

    patches = jnp.pad(patches.astype(jnp.bfloat16),
                      ((0, m_pad - m), (0, k_tot - kdim)))

    in_specs = [
        pl.BlockSpec((tm, p['tk']), lambda i, j, kk: (i, kk)),
        pl.BlockSpec((p['tk'], tn), lambda i, j, kk: (kk, j)),
        pl.BlockSpec((1, tn), lambda i, j, kk: (0, j)),
        pl.BlockSpec((1, tn), lambda i, j, kk: (0, j)),
    ]
    args = [patches, p['w'], p['scale'], p['bias']]
    if residual is not None:
        res = residual.reshape(m, -1).astype(jnp.bfloat16)
        res = jnp.pad(res, ((0, m_pad - m), (0, n_tot - res.shape[1])))
        in_specs.append(pl.BlockSpec((tm, tn), lambda i, j, kk: (i, j)))
        args.append(res)

    out = pl.pallas_call(
        functools.partial(_matmul_kernel, relu=relu,
                          has_res=residual is not None),
        out_shape=jax.ShapeDtypeStruct((m_pad, n_tot), jnp.bfloat16),
        grid=(n_m, n_n, p['n_k']),
        in_specs=in_specs,
        out_specs=pl.BlockSpec((tm, tn), lambda i, j, kk: (i, j)),
        scratch_shapes=[pltpu.VMEM((tm, tn), jnp.float32)],
        compiler_params=_compiler_params(("parallel", "parallel", "arbitrary")),
    )(*args)

    out = out[:m]
    if n_tot != cout:
        out = out[:, :cout]
    return out.reshape(n, ho, wo, cout)


def grouped_conv_bn_act(x, p, *, stride):
    """nums independent (width -> width) 3x3 convs as ONE grouped matmul.

    Branch grid axis is parallel; each branch writes its own lane-dense
    128-padded block of the concat-ordered output slab (M, nums * n_pad).
    """
    nums, width, n_pad = p['nums'], p['width'], p['n_pad']
    sl, (n, ho, wo) = _shifted_slices(x, 3, stride, 1, 0.0)
    m = n * ho * wo
    # (9, m, nums*width) -> (nums, m, 9*width): per-branch im2col patches with
    # (tap, channel) row order matching the per-branch weight layout.
    stacked = jnp.stack(sl, axis=0).reshape(9, m, nums, width)
    patches = jnp.transpose(stacked, (2, 1, 0, 3)).reshape(nums, m, 9 * width)

    k_tot = p['tk'] * p['n_k']
    m_pad, tm, n_m = _m_tiling(m)
    patches = jnp.pad(patches.astype(jnp.bfloat16),
                      ((0, 0), (0, m_pad - m), (0, k_tot - 9 * width)))

    out = pl.pallas_call(
        functools.partial(_matmul_kernel, relu=True, has_res=False),
        out_shape=jax.ShapeDtypeStruct((m_pad, nums * n_pad), jnp.bfloat16),
        grid=(nums, n_m, p['n_k']),
        in_specs=[
            pl.BlockSpec((None, tm, p['tk']), lambda b, i, kk: (b, i, kk)),
            pl.BlockSpec((None, p['tk'], n_pad), lambda b, i, kk: (b, kk, 0)),
            pl.BlockSpec((None, 1, n_pad), lambda b, i, kk: (b, 0, 0)),
            pl.BlockSpec((None, 1, n_pad), lambda b, i, kk: (b, 0, 0)),
        ],
        out_specs=pl.BlockSpec((tm, n_pad), lambda b, i, kk: (i, b)),
        scratch_shapes=[pltpu.VMEM((tm, n_pad), jnp.float32)],
        compiler_params=_compiler_params(("parallel", "parallel", "arbitrary")),
    )(patches, p['w'], p['scale'], p['bias'])

    return out[:m].reshape(n, ho, wo, nums * n_pad)


def _pool(x, *, k, stride, pad, kind, keep_c_pad=False):
    # kind='avg' with k==stride covers the downsample AvgPool2d(stride, stride):
    # at these shapes windows divide evenly, so dividing by k*k is exact.
    # TODO(synk): ceil_mode=True / count_include_pad=False partial edge windows
    # (and all-padding max-pool windows) never occur at these shapes.
    if k == 1 and stride == 1 and pad == 0:
        return x
    pad_value = float('-inf') if kind == 'max' else 0.0
    c = x.shape[-1]
    c_pad = _round_up(c, 128)            # lane-dense pool stores
    if c_pad != c:
        x = jnp.pad(x, ((0, 0), (0, 0), (0, 0), (0, c_pad - c)))
    sl, (n, ho, wo) = _shifted_slices(x, k, stride, pad, pad_value)
    m = n * ho * wo
    cols = jnp.stack(sl, axis=0).reshape(k * k, m, c_pad)
    m_pad, tm, n_m = _m_tiling(m)
    if m_pad != m:
        cols = jnp.pad(cols, ((0, 0), (0, m_pad - m), (0, 0)),
                       constant_values=pad_value)
    kernel = (_pool_max_kernel if kind == 'max'
              else functools.partial(_pool_avg_kernel, inv=1.0 / (k * k)))
    out = pl.pallas_call(
        kernel,
        out_shape=jax.ShapeDtypeStruct((m_pad, c_pad), x.dtype),
        grid=(n_m,),
        in_specs=[pl.BlockSpec((k * k, tm, c_pad), lambda i: (0, i, 0))],
        out_specs=pl.BlockSpec((tm, c_pad), lambda i: (i, 0)),
        compiler_params=_compiler_params(("parallel",)),
    )(cols)
    out = out[:m].reshape(n, ho, wo, c_pad)
    return out if keep_c_pad else out[..., :c]


# ---------------------------------------------------------------------------
# Deterministic parameter construction (mirrors the PyTorch __init__ shapes).
# ---------------------------------------------------------------------------
class _KeyGen:
    def __init__(self, key):
        self._key = key

    def __call__(self):
        self._key, sub = jax.random.split(self._key)
        return sub


def _make_conv_bn_raw(kg, cin, cout, k):
    # kaiming_normal_(mode='fan_out', nonlinearity='relu'): std = sqrt(2/(cout*k*k))
    std = math.sqrt(2.0 / (cout * k * k))
    w = jax.random.normal(kg(), (k, k, cin, cout), jnp.float32) * std
    w = w.reshape(k * k * cin, cout)
    # BatchNorm folded (inference): gamma=1, beta=0, running_mean=0, running_var=1.
    scale = jnp.full((cout,), 1.0 / math.sqrt(1.0 + _BN_EPS), jnp.float32)
    bias = jnp.zeros((cout,), jnp.float32)
    return w, scale, bias


def _finalize_conv(w2d, scale, bias, k, cout):
    kdim = w2d.shape[0]
    k_tot, tk, n_k = _k_tiling(kdim)
    n_tot, tn, n_n = _n_tiling(cout)
    w = jnp.pad(w2d, ((0, k_tot - kdim), (0, n_tot - cout))).astype(jnp.bfloat16)
    scale = jnp.pad(scale, (0, n_tot - cout))[None, :]
    bias = jnp.pad(bias, (0, n_tot - cout))[None, :]
    return {'w': w, 'scale': scale, 'bias': bias, 'k': k, 'cout': cout,
            'tk': tk, 'n_k': n_k, 'tn': tn, 'n_n': n_n, 'n_tot': n_tot}


def _make_conv_bn(kg, cin, cout, k):
    w, s, b = _make_conv_bn_raw(kg, cin, cout, k)
    return _finalize_conv(w, s, b, k, cout)


def _make_branch_group(kg, width, nums):
    """nums independent (width->width) 3x3 convs stacked for the grouped matmul."""
    kdim = 9 * width
    k_tot, tk, n_k = _k_tiling(kdim)
    n_pad = _round_up(width, 128)        # lane-dense per-branch output block
    ws, ss, bs = [], [], []
    for _ in range(nums):
        w, s, b = _make_conv_bn_raw(kg, width, width, 3)
        ws.append(jnp.pad(w, ((0, k_tot - kdim), (0, n_pad - width))))
        ss.append(jnp.pad(s, (0, n_pad - width))[None, :])
        bs.append(jnp.pad(b, (0, n_pad - width))[None, :])
    return {'w': jnp.stack(ws).astype(jnp.bfloat16),
            'scale': jnp.stack(ss), 'bias': jnp.stack(bs),
            'width': width, 'nums': nums,
            'tk': tk, 'n_k': n_k, 'n_pad': n_pad}


def _make_stage_conv3(kg, width, nums, scale_factor, npad_b, cout):
    """conv3 whose input-channel rows match the 128-padded branch/pool slab."""
    cin = width * scale_factor
    w, s, b = _make_conv_bn_raw(kg, cin, cout, 1)
    cpad_last = _round_up(width, 128) if scale_factor != 1 else 0
    cin_layout = nums * npad_b + cpad_last
    w_lay = jnp.zeros((cin_layout, cout), jnp.float32)
    for br in range(nums):
        w_lay = w_lay.at[br * npad_b: br * npad_b + width].set(
            w[br * width:(br + 1) * width])
    if scale_factor != 1:
        w_lay = w_lay.at[nums * npad_b: nums * npad_b + width].set(
            w[nums * width:cin])
    return _finalize_conv(w_lay, s, b, 1, cout)


def _make_bottle2neck(kg, inplanes, planes, stride, has_down, stype,
                      base_width, scale):
    width = int(math.floor(planes * (base_width / 64.0)))
    nums = 1 if scale == 1 else scale - 1
    cout3 = planes * _EXPANSION
    blk = {'stride': stride, 'stype': stype, 'width': width,
           'scale': scale, 'nums': nums}
    blk['conv1'] = _make_conv_bn(kg, inplanes, width * scale, 1)
    if stype == 'stage':
        blk['branches'] = _make_branch_group(kg, width, nums)
        blk['convs'] = None
        blk['conv3'] = _make_stage_conv3(kg, width, nums, scale,
                                         blk['branches']['n_pad'], cout3)
    else:
        blk['branches'] = None
        blk['convs'] = [_make_conv_bn(kg, width, width, 3) for _ in range(nums)]
        blk['conv3'] = _make_conv_bn(kg, width * scale, cout3, 1)
    blk['down'] = _make_conv_bn(kg, inplanes, cout3, 1) if has_down else None
    return blk


def make_res2net_params(key, layers, base_width=26, scale=4, output_stride=16,
                        rgb_only=False):
    kg = _KeyGen(key)
    in_ch = 3 if rgb_only else 4
    params = {
        'stem0': _make_conv_bn(kg, in_ch, 32, 3),
        'stem1': _make_conv_bn(kg, 32, 32, 3),
        'stem2': _make_conv_bn(kg, 32, 64, 3),   # self.bn1 folded into this conv
    }
    inplanes = 64
    current_stride = 4
    stages = []
    for planes, blocks, stride in ((64, layers[0], 1), (128, layers[1], 2),
                                   (256, layers[2], 2), (512, layers[3], 2)):
        has_down = (stride != 1) or (inplanes != planes * _EXPANSION)
        if has_down:
            if current_stride == output_stride:
                stride = 1
            else:
                current_stride = current_stride * stride
        stage = [_make_bottle2neck(kg, inplanes, planes, stride, has_down,
                                   'stage', base_width, scale)]
        inplanes = planes * _EXPANSION
        for _ in range(1, blocks):
            stage.append(_make_bottle2neck(kg, inplanes, planes, 1, False,
                                           'normal', base_width, scale))
        stages.append(stage)
    params['stages'] = stages
    params['fc'] = _make_conv_bn(kg, inplanes, 512, 3)
    return params


# ---------------------------------------------------------------------------
# Forward pass (semantics of Res2Net.forward + Bottle2neck.forward).
# ---------------------------------------------------------------------------
def _bottle2neck_forward(blk, x):
    stride, width, scale = blk['stride'], blk['width'], blk['scale']
    stype, nums = blk['stype'], blk['nums']

    out = conv_bn_act(x, blk['conv1'], relu=True)

    if stype == 'stage':
        # All branch 3x3 convs in one grouped matmul; output slab is already the
        # 128-padded concatenation [sp_0 | sp_1 | ... | sp_{nums-1}].
        slab = grouped_conv_bn_act(out[..., :nums * width], blk['branches'],
                                   stride=stride)
        if scale != 1:
            # AvgPool2d(3, stride, padding=1), count_include_pad=True -> /9.
            last = _pool(out[..., nums * width:scale * width],
                         k=3, stride=stride, pad=1, kind='avg', keep_c_pad=True)
            cat = jnp.concatenate([slab, last], axis=-1)
        else:
            cat = slab
    else:
        spx = [out[..., i * width:(i + 1) * width] for i in range(scale)]
        pieces = []
        sp = None
        for i in range(nums):
            sp = spx[i] if i == 0 else sp + spx[i]   # tiny elementwise glue
            sp = conv_bn_act(sp, blk['convs'][i], stride=stride, pad=1, relu=True)
            pieces.append(sp)
        if scale != 1:
            pieces.append(spx[nums])
        cat = pieces[0] if len(pieces) == 1 else jnp.concatenate(pieces, axis=-1)

    if blk['down'] is not None:
        r = x
        if stride != 1:
            # TODO(synk): PyTorch downsample AvgPool2d uses ceil_mode=True,
            # count_include_pad=False; dividing by k*k is exact only when the
            # spatial dims divide evenly by `stride` (true for all shapes here).
            r = _pool(x, k=stride, stride=stride, pad=0, kind='avg')
        residual = conv_bn_act(r, blk['down'], relu=False)
    else:
        residual = x

    # conv3 + BN + residual add + ReLU fused into one matmul epilogue.
    return conv_bn_act(cat, blk['conv3'], relu=True, residual=residual)


def res2net_forward(params, x_nchw):
    x = jnp.transpose(x_nchw, (0, 2, 3, 1)).astype(jnp.bfloat16)  # NCHW -> NHWC
    # conv1 sequential + bn1 + relu (bn1 folded into the third conv).
    x = conv_bn_act(x, params['stem0'], stride=2, pad=1, relu=True)
    x = conv_bn_act(x, params['stem1'], stride=1, pad=1, relu=True)
    x2s = conv_bn_act(x, params['stem2'], stride=1, pad=1, relu=True)
    x = _pool(x2s, k=3, stride=2, pad=1, kind='max')

    feats = []
    for stage in params['stages']:
        for blk in stage:
            x = _bottle2neck_forward(blk, x)
        feats.append(x)
    x4s, x8s, x16s, x_l4 = feats

    x = conv_bn_act(x_l4, params['fc'], stride=1, pad=1, relu=True)
    return tuple(o.astype(jnp.float32) for o in (x2s, x4s, x8s, x16s, x))


if __name__ == "__main__":
    key = jax.random.PRNGKey(0)
    pkey, xkey = jax.random.split(key)

    # Small Res2Net config: layers=[2,1,1,1], baseWidth=26, scale=4,
    # output_stride=16, rgb_only=False (4 input channels).
    params = make_res2net_params(pkey, layers=[2, 1, 1, 1], base_width=26,
                                 scale=4, output_stride=16, rgb_only=False)

    x = jax.random.normal(xkey, (2, 4, 16, 16), jnp.float32)  # NCHW input

    outs = res2net_forward(params, x)
    outs = jax.block_until_ready(outs)

    # Shape sanity checks (NHWC).
    assert outs[0].shape == (2, 8, 8, 64)      # x2s
    assert outs[1].shape == (2, 4, 4, 256)     # x4s
    assert outs[2].shape == (2, 2, 2, 512)     # x8s
    assert outs[3].shape == (2, 1, 1, 1024)    # x16s
    assert outs[4].shape == (2, 1, 1, 512)     # fc output
    assert all(bool(jnp.all(jnp.isfinite(o))) for o in outs)

    print("KERNEL_OK")
</pallas_src>

<mosaic_0001>
module attributes {stable_mosaic.version = 11 : i64} {
  func.func @_matmul_kernel(%arg0: i32, %arg1: i32, %arg2: i32, %arg3: memref<128x128xbf16, #tpu.memory_space<vmem>>, %arg4: memref<128x128xbf16, #tpu.memory_space<vmem>>, %arg5: memref<1x128xf32, #tpu.memory_space<vmem>>, %arg6: memref<1x128xf32, #tpu.memory_space<vmem>>, %arg7: memref<128x128xbf16, #tpu.memory_space<vmem>>, %arg8: memref<128x128xf32, #tpu.memory_space<vmem>>) attributes {dimension_semantics = [#tpu.dimension_semantics<parallel>, #tpu.dimension_semantics<parallel>, #tpu.dimension_semantics<arbitrary>], iteration_bounds = array<i64: 1, 1, 1>, scalar_prefetch = 0 : i64, scratch_operands = 1 : i64, tpu.core_type = #tpu.core_type<tc>, window_params = [{transform_indices = @transform_0, window_bounds = array<i64: 128, 128>}, {transform_indices = @transform_1, window_bounds = array<i64: 128, 128>}, {transform_indices = @transform_2, window_bounds = array<i64: 1, 128>}, {transform_indices = @transform_3, window_bounds = array<i64: 1, 128>}, {transform_indices = @transform_4, window_bounds = array<i64: 128, 128>}]} {
    %c0_i32 = arith.constant 0 : i32
    %0 = arith.cmpi eq, %arg2, %c0_i32 : i32
    %1 = arith.extui %0 : i1 to i32
    %c0_i32_0 = arith.constant 0 : i32
    %2 = arith.cmpi ne, %1, %c0_i32_0 : i32
    scf.if %2 {
      %cst_10 = arith.constant 0.000000e+00 : f32
      %12 = vector.broadcast %cst_10 : f32 to vector<128x128xf32>
      %c0_11 = arith.constant 0 : index
      %c0_12 = arith.constant 0 : index
      %13 = vector.load %arg8[%c0_11, %c0_12] : memref<128x128xf32, #tpu.memory_space<vmem>>, vector<128x128xf32>
      tpu.vector_store %arg8[%c0_11, %c0_12], %12 {strides = array<i32>} : memref<128x128xf32, #tpu.memory_space<vmem>>, vector<128x128xf32>,
    } else {
    }
    %c0 = arith.constant 0 : index
    %c0_1 = arith.constant 0 : index
    %3 = vector.load %arg8[%c0, %c0_1] : memref<128x128xf32, #tpu.memory_space<vmem>>, vector<128x128xf32>
    %c0_2 = arith.constant 0 : index
    %c0_3 = arith.constant 0 : index
    %4 = vector.load %arg3[%c0_2, %c0_3] : memref<128x128xbf16, #tpu.memory_space<vmem>>, vector<128x128xbf16>
    %c0_4 = arith.constant 0 : index
    %c0_5 = arith.constant 0 : index
    %5 = vector.load %arg4[%c0_4, %c0_5] : memref<128x128xbf16, #tpu.memory_space<vmem>>, vector<128x128xbf16>
    %cst = arith.constant dense<0.000000e+00> : vector<128x128xf32>
    %6 = tpu.matmul %4, %5, %cst {dimension_numbers = #tpu.dot_dimension_numbers<[1], [0], [0], [1], [0, 0, 1, 1], [], []>} : vector<128x128xbf16>, vector<128x128xbf16>, vector<128x128xf32> -> vector<128x128xf32>
    %7 = arith.addf %3, %6 : vector<128x128xf32>
    %c0_6 = arith.constant 0 : index
    %c0_7 = arith.constant 0 : index
    %8 = vector.load %arg8[%c0_6, %c0_7] : memref<128x128xf32, #tpu.memory_space<vmem>>, vector<128x128xf32>
    tpu.vector_store %arg8[%c0_6, %c0_7], %7 {strides = array<i32>} : memref<128x128xf32, #tpu.memory_space<vmem>>, vector<128x128xf32>,
    %c0_i32_8 = arith.constant 0 : i32
    %9 = arith.cmpi eq, %arg2, %c0_i32_8 : i32
    %10 = arith.extui %9 : i1 to i32
    %c0_i32_9 = arith.constant 0 : i32
    %11 = arith.cmpi ne, %10, %c0_i32_9 : i32
    scf.if %11 {
      %c0_10 = arith.constant 0 : index
      %c0_11 = arith.constant 0 : index
      %12 = vector.load %arg8[%c0_10, %c0_11] : memref<128x128xf32, #tpu.memory_space<vmem>>, vector<128x128xf32>
      %c0_12 = arith.constant 0 : index
      %c0_13 = arith.constant 0 : index
      %13 = vector.load %arg5[%c0_12, %c0_13] : memref<1x128xf32, #tpu.memory_space<vmem>>, vector<1x128xf32>
      %14 = vector.broadcast %13 : vector<1x128xf32> to vector<128x128xf32>
      %15 = arith.mulf %12, %14 : vector<128x128xf32>
      %c0_14 = arith.constant 0 : index
      %c0_15 = arith.constant 0 : index
      %16 = vector.load %arg6[%c0_14, %c0_15] : memref<1x128xf32, #tpu.memory_space<vmem>>, vector<1x128xf32>
      %17 = vector.broadcast %16 : vector<1x128xf32> to vector<128x128xf32>
      %18 = arith.addf %15, %17 : vector<128x128xf32>
      %cst_16 = arith.constant 0.000000e+00 : f32
      %19 = vector.broadcast %cst_16 : f32 to vector<128x128xf32>
      %20 = arith.maximumf %18, %19 : vector<128x128xf32>
      %21 = arith.truncf %20 : vector<128x128xf32> to vector<128x128xbf16>
      %c0_17 = arith.constant 0 : index
      %c0_18 = arith.constant 0 : index
      %22 = vector.load %arg7[%c0_17, %c0_18] : memref<128x128xbf16, #tpu.memory_space<vmem>>, vector<128x128xbf16>
      tpu.vector_store %arg7[%c0_17, %c0_18], %21 {strides = array<i32>} : memref<128x128xbf16, #tpu.memory_space<vmem>>, vector<128x128xbf16>,
    } else {
    }
    return
  }
  func.func @transform_0(%arg0: i32, %arg1: i32, %arg2: i32) -> (i32, i32) {
    %c0_i32 = arith.constant 0 : i32
    return %arg0, %arg2 : i32, i32
  }
  func.func @transform_1(%arg0: i32, %arg1: i32, %arg2: i32) -> (i32, i32) {
    %c0_i32 = arith.constant 0 : i32
    return %arg2, %arg1 : i32, i32
  }
  func.func @transform_2(%arg0: i32, %arg1: i32, %arg2: i32) -> (i32, i32) {
    %c0_i32 = arith.constant 0 : i32
    %c0_i32_0 = arith.constant 0 : i32
    return %c0_i32, %arg1 : i32, i32
  }
  func.func @transform_3(%arg0: i32, %arg1: i32, %arg2: i32) -> (i32, i32) {
    %c0_i32 = arith.constant 0 : i32
    %c0_i32_0 = arith.constant 0 : i32
    return %c0_i32, %arg1 : i32, i32
  }
  func.func @transform_4(%arg0: i32, %arg1: i32, %arg2: i32) -> (i32, i32) {
    %c0_i32 = arith.constant 0 : i32
    return %arg0, %arg1 : i32, i32
  }
}

</mosaic_0001>

<llo_original>
// kernel: tpu_custom_call.1
$region0: #{tpu_custom_call.1}
  #allocation0 [shape = 'u32[]', space=smem, size = 0x4, offset = 0x4, fixed_abs, tag = 'smem constant byte address 0x4 - core index']
  #allocation1 [shape = 'u32[144,128]{1,0:T(1,128)}', space=vmem, size = 0x12000, scoped, tag = 'internal scratch']
  #allocation2 [shape = 'f32[128,128]{1,0:T(8,128)}', space=vmem, size = 0x10000, scoped, tag = 'scratch operand']
  %s0 = inlined_call_operand.hbm [shape: bf16[128,128], index: 0, kind: input, shape index: {}]
  %s1 = inlined_call_operand.hbm [shape: bf16[128,128], index: 1, kind: input, shape index: {}]
  %s2 = inlined_call_operand.vmem [shape: f32[1,128], index: 2, kind: input, shape index: {}]
  %s3 = inlined_call_operand.vmem [shape: f32[1,128], index: 3, kind: input, shape index: {}]
  %s4 = inlined_call_operand.hbm [shape: bf16[128,128], index: 4, kind: output, shape index: {}]
  %s5 = sld [smem:[#allocation0]]
  $region42: #{tpu_custom_call.1} parent=0
    _
  %s7 = ssub.s32 1, %s5
  %s8 = scalar_select 0, %s7, %s5
  $region1: #{tpu_custom_call.1} parent=0
    #allocation3 [shape = 'u8[32768]{0}', space=vmem, size = 0x8000, scoped, tag = 'input window, operand 0, single buffered']
    #allocation4 [shape = 's32[1]{0}', space=sflag, size = 0x4, scoped, tag = 'scoped memory for tpu_custom_call.1']
    #allocation5 [shape = 's32[1]{0}', space=sflag, size = 0x4, scoped, tag = 'scoped memory for tpu_custom_call.1']
    #allocation6 [shape = 'u8[32768]{0}', space=vmem, size = 0x8000, scoped, tag = 'input window, operand 1, single buffered']
    #allocation7 [shape = 's32[1]{0}', space=sflag, size = 0x4, scoped, tag = 'scoped memory for tpu_custom_call.1']
    #allocation8 [shape = 'u8[32768]{0}', space=vmem, size = 0x8000, scoped, tag = 'output window, operand 0, single buffered']
    %9 = vsyncpa [#allocation4], 0
    %10 = vsyncpa [#allocation7], 0
    %11 = vsyncpa [#allocation5], 0
    // Predicated region
    $region2: #{tpu_custom_call.1} parent=1 // pred_check
      _
    $region3: #{tpu_custom_call.1} parent=1 // pred_check_branch
      %13 = sbr.rel (0) target = $region5
    $region4: #{tpu_custom_call.1} parent=1 // pred_region
      %s15 = ssub.s32 1024, 1024
      %16 = vsyncadd [#allocation4], %s15
      %s17 = sshll.u32 [#allocation3], 4
      %s18 = int_to_ptr.vmem [resolvable:$true] %s17
      %23 = dma.hbm_to_vmem [thread:$0]  %s0, 1024, %s18, [#allocation4], 64, 64, 4
    $region5: #{tpu_custom_call.1} parent=1 // pred_fallthru
      _
    // Predicated region
    $region6: #{tpu_custom_call.1} parent=1 // pred_check
      _
    $region7: #{tpu_custom_call.1} parent=1 // pred_check_branch
      %25 = sbr.rel (0) target = $region9
    $region8: #{tpu_custom_call.1} parent=1 // pred_region
      %s27 = ssub.s32 1024, 1024
      %28 = vsyncadd [#allocation7], %s27
      %s29 = sshll.u32 [#allocation6], 4
      %s30 = int_to_ptr.vmem [resolvable:$true] %s29
      %35 = dma.hbm_to_vmem [thread:$0]  %s1, 1024, %s30, [#allocation7], 64, 64, 4
    $region9: #{tpu_custom_call.1} parent=1 // pred_fallthru
      _
    // Predicated region
    $region10: #{tpu_custom_call.1} parent=1 // pred_check
      _
    $region11: #{tpu_custom_call.1} parent=1 // pred_check_branch
      %37 = sbr.rel (0) target = $region13
    $region12: #{tpu_custom_call.1} parent=1 // pred_region
      _
    $region13: #{tpu_custom_call.1} parent=1 // pred_fallthru
      _
    // Predicated region
    $region14: #{tpu_custom_call.1} parent=1 // pred_check
      _
    $region15: #{tpu_custom_call.1} parent=1 // pred_check_branch
      %39 = sbr.rel (0) target = $region17
    $region16: #{tpu_custom_call.1} parent=1 // pred_region
      _
    $region17: #{tpu_custom_call.1} parent=1 // pred_fallthru
      _
    // Predicated region
    $region18: #{tpu_custom_call.1} parent=1 // pred_check
      _
    $region19: #{tpu_custom_call.1} parent=1 // pred_check_branch
      %41 = sbr.rel (0) target = $region21
    $region20: #{tpu_custom_call.1} parent=1 // pred_region
      %42 = dma.done [#allocation4], 1024
    $region21: #{tpu_custom_call.1} parent=1 // pred_fallthru
      _
    // Predicated region
    $region22: #{tpu_custom_call.1} parent=1 // pred_check
      _
    $region23: #{tpu_custom_call.1} parent=1 // pred_check_branch
      %44 = sbr.rel (0) target = $region25
    $region24: #{tpu_custom_call.1} parent=1 // pred_region
      %45 = dma.done [#allocation7], 1024
    $region25: #{tpu_custom_call.1} parent=1 // pred_fallthru
      _
    %p47 = scmp.eq.s32.totalorder 0, 0
    // Predicated region
    $region26: #{tpu_custom_call.1} parent=1 // pred_check
      %p48 = pneg %p47
    $region27: #{tpu_custom_call.1} parent=1 // pred_check_branch
      %50 = sbr.rel (%p48) target = $region29
    $region28: #{tpu_custom_call.1} parent=1 // pred_region
      %51 = vst [vmem:[#allocation2] sm:$0xff] 0.0
      %52 = vst [vmem:[#allocation2 + $0x8] sm:$0xff] 0.0
      %53 = vst [vmem:[#allocation2 + $0x10] sm:$0xff] 0.0
      %54 = vst [vmem:[#allocation2 + $0x18] sm:$0xff] 0.0
      %55 = vst [vmem:[#allocation2 + $0x20] sm:$0xff] 0.0
      %56 = vst [vmem:[#allocation2 + $0x28] sm:$0xff] 0.0
      %57 = vst [vmem:[#allocation2 + $0x30] sm:$0xff] 0.0
      %58 = vst [vmem:[#allocation2 + $0x38] sm:$0xff] 0.0
      %59 = vst [vmem:[#allocation2 + $0x40] sm:$0xff] 0.0
      %60 = vst [vmem:[#allocation2 + $0x48] sm:$0xff] 0.0
      %61 = vst [vmem:[#allocation2 + $0x50] sm:$0xff] 0.0
      %62 = vst [vmem:[#allocation2 + $0x58] sm:$0xff] 0.0
      %63 = vst [vmem:[#allocation2 + $0x60] sm:$0xff] 0.0
      %64 = vst [vmem:[#allocation2 + $0x68] sm:$0xff] 0.0
      %65 = vst [vmem:[#allocation2 + $0x70] sm:$0xff] 0.0
      %66 = vst [vmem:[#allocation2 + $0x78] sm:$0xff] 0.0
    $region29: #{tpu_custom_call.1} parent=1 // pred_fallthru
      _
    %v67 = vld [vmem:[#allocation2] sm:$0xff]
    %v68 = vld [vmem:[#allocation2 + $0x8] sm:$0xff]
    %v69 = vld [vmem:[#allocation2 + $0x10] sm:$0xff]
    %v70 = vld [vmem:[#allocation2 + $0x18] sm:$0xff]
    %v71 = vld [vmem:[#allocation2 + $0x20] sm:$0xff]
    %v72 = vld [vmem:[#allocation2 + $0x28] sm:$0xff]
    %v73 = vld [vmem:[#allocation2 + $0x30] sm:$0xff]
    %v74 = vld [vmem:[#allocation2 + $0x38] sm:$0xff]
    %v75 = vld [vmem:[#allocation2 + $0x40] sm:$0xff]
    %v76 = vld [vmem:[#allocation2 + $0x48] sm:$0xff]
    %v77 = vld [vmem:[#allocation2 + $0x50] sm:$0xff]
    %v78 = vld [vmem:[#allocation2 + $0x58] sm:$0xff]
    %v79 = vld [vmem:[#allocation2 + $0x60] sm:$0xff]
    %v80 = vld [vmem:[#allocation2 + $0x68] sm:$0xff]
    %v81 = vld [vmem:[#allocation2 + $0x70] sm:$0xff]
    %v82 = vld [vmem:[#allocation2 + $0x78] sm:$0xff]
    %v83 = vld [vmem:[#allocation3] sm:$0xf]
    %v84 = vld [vmem:[#allocation3 + $0x4] sm:$0xf]
    %v85 = vld [vmem:[#allocation3 + $0x8] sm:$0xf]
    %v86 = vld [vmem:[#allocation3 + $0xc] sm:$0xf]
    %v87 = vld [vmem:[#allocation3 + $0x10] sm:$0xf]
    %v88 = vld [vmem:[#allocation3 + $0x14] sm:$0xf]
    %v89 = vld [vmem:[#allocation3 + $0x18] sm:$0xf]
    %v90 = vld [vmem:[#allocation3 + $0x1c] sm:$0xf]
    %v91 = vld [vmem:[#allocation3 + $0x20] sm:$0xf]
    %v92 = vld [vmem:[#allocation3 + $0x24] sm:$0xf]
    %v93 = vld [vmem:[#allocation3 + $0x28] sm:$0xf]
    %v94 = vld [vmem:[#allocation3 + $0x2c] sm:$0xf]
    %v95 = vld [vmem:[#allocation3 + $0x30] sm:$0xf]
    %v96 = vld [vmem:[#allocation3 + $0x34] sm:$0xf]
    %v97 = vld [vmem:[#allocation3 + $0x38] sm:$0xf]
    %v98 = vld [vmem:[#allocation3 + $0x3c] sm:$0xf]
    %v99 = vld [vmem:[#allocation6] sm:$0xf]
    %v100 = vld [vmem:[#allocation6 + $0x4] sm:$0xf]
    %v101 = vld [vmem:[#allocation6 + $0x8] sm:$0xf]
    %v102 = vld [vmem:[#allocation6 + $0xc] sm:$0xf]
    %v103 = vld [vmem:[#allocation6 + $0x10] sm:$0xf]
    %v104 = vld [vmem:[#allocation6 + $0x14] sm:$0xf]
    %v105 = vld [vmem:[#allocation6 + $0x18] sm:$0xf]
    %v106 = vld [vmem:[#allocation6 + $0x1c] sm:$0xf]
    %v107 = vld [vmem:[#allocation6 + $0x20] sm:$0xf]
    %v108 = vld [vmem:[#allocation6 + $0x24] sm:$0xf]
    %v109 = vld [vmem:[#allocation6 + $0x28] sm:$0xf]
    %v110 = vld [vmem:[#allocation6 + $0x2c] sm:$0xf]
    %v111 = vld [vmem:[#allocation6 + $0x30] sm:$0xf]
    %v112 = vld [vmem:[#allocation6 + $0x34] sm:$0xf]
    %v113 = vld [vmem:[#allocation6 + $0x38] sm:$0xf]
    %v114 = vld [vmem:[#allocation6 + $0x3c] sm:$0xf]
    %v131 = vunpack.c.l.b16 %v83
    %v132 = vunpack.c.l.b16 %v84
    %v133 = vunpack.c.l.b16 %v85
    %v134 = vunpack.c.l.b16 %v86
    %v135 = vunpack.c.l.b16 %v87
    %v136 = vunpack.c.l.b16 %v88
    %v137 = vunpack.c.l.b16 %v89
    %v138 = vunpack.c.l.b16 %v90
    %v139 = vunpack.c.l.b16 %v91
    %v140 = vunpack.c.l.b16 %v92
    %v141 = vunpack.c.l.b16 %v93
    %v142 = vunpack.c.l.b16 %v94
    %v143 = vunpack.c.l.b16 %v95
    %v144 = vunpack.c.l.b16 %v96
    %v145 = vunpack.c.l.b16 %v97
    %v146 = vunpack.c.l.b16 %v98
    %v147 = vpack.c.b16 %v132, %v131
    %v148 = vpack.c.b16 %v134, %v133
    %v149 = vpack.c.b16 %v136, %v135
    %v150 = vpack.c.b16 %v138, %v137
    %v151 = vpack.c.b16 %v140, %v139
    %v152 = vpack.c.b16 %v142, %v141
    %v153 = vpack.c.b16 %v144, %v143
    %v154 = vpack.c.b16 %v146, %v145
    %v179 = vunpack.c.l.b16 %v99
    %v180 = vunpack.c.l.b16 %v100
    %v181 = vunpack.c.l.b16 %v101
    %v182 = vunpack.c.l.b16 %v102
    %v183 = vunpack.c.l.b16 %v103
    %v184 = vunpack.c.l.b16 %v104
    %v185 = vunpack.c.l.b16 %v105
    %v186 = vunpack.c.l.b16 %v106
    %v187 = vunpack.c.l.b16 %v107
    %v188 = vunpack.c.l.b16 %v108
    %v189 = vunpack.c.l.b16 %v109
    %v190 = vunpack.c.l.b16 %v110
    %v191 = vunpack.c.l.b16 %v111
    %v192 = vunpack.c.l.b16 %v112
    %v193 = vunpack.c.l.b16 %v113
    %v194 = vunpack.c.l.b16 %v114
    %v195 = vpack.c.b16 %v180, %v179
    %v196 = vpack.c.b16 %v182, %v181
    %v197 = vpack.c.b16 %v184, %v183
    %v198 = vpack.c.b16 %v186, %v185
    %v199 = vpack.c.b16 %v188, %v187
    %v200 = vpack.c.b16 %v190, %v189
    %v201 = vpack.c.b16 %v192, %v191
    %v202 = vpack.c.b16 %v194, %v193
    %211 = vmatprep.subr.bf16.mxu0 0
    %212 = vmatpush1.bf16.msra.mxu0 %v195
    %213 = vmatprep.subr.bf16.mxu0 0
    %214 = vmatpush1.bf16.msra.mxu0 %v196
    %215 = vmatprep.subr.bf16.mxu0 0
    %216 = vmatpush1.bf16.msra.mxu0 %v197
    %217 = vmatprep.subr.bf16.mxu0 0
    %218 = vmatpush1.bf16.msra.mxu0 %v198
    %219 = vmatprep.subr.bf16.mxu0 0
    %220 = vmatpush1.bf16.msra.mxu0 %v199
    %221 = vmatprep.subr.bf16.mxu0 0
    %222 = vmatpush1.bf16.msra.mxu0 %v200
    %223 = vmatprep.subr.bf16.mxu0 0
    %224 = vmatpush1.bf16.msra.mxu0 %v201
    %225 = vmatprep.subr.bf16.mxu0 0
    %226 = vmatpush1.bf16.msra.mxu0 %v202
    %227 = vmatprep.subr.bf16.mxu0 0
    %228 = vmatpush1.bf16.msra.mxu0 0
    %229 = vmatprep.subr.bf16.mxu0 0
    %230 = vmatpush1.bf16.msra.mxu0 0
    %231 = vmatprep.subr.bf16.mxu0 0
    %232 = vmatpush1.bf16.msra.mxu0 0
    %233 = vmatprep.subr.bf16.mxu0 0
    %234 = vmatpush1.bf16.msra.mxu0 0
    %235 = vmatprep.subr.bf16.mxu0 0
    %236 = vmatpush1.bf16.msra.mxu0 0
    %237 = vmatprep.subr.bf16.mxu0 0
    %238 = vmatpush1.bf16.msra.mxu0 0
    %239 = vmatprep.subr.bf16.mxu0 0
    %240 = vmatpush1.bf16.msra.mxu0 0
    %241 = vmatprep.subr.bf16.mxu0 0
    %242 = vmatpush1.bf16.msra.mxu0 0
    %243 = vmatprep.mubr.bf16.mxu0 0
    %244 = vmatmul.mubr.bf16.gmra.mrb[0].mxu0 %v147
    %v245 = vpop.f32.mrb[0].mxu0
    %v246 = vadd.f32 0.0, %v245
    %v247 = vpop.f32.mrb[0].mxu0
    %v248 = vpop.f32.mrb[0].mxu0
    %v249 = vadd.f32 0.0, %v248
    %v250 = vpop.f32.mrb[0].mxu0
    %251 = vmatprep.mubr.bf16.mxu0 0
    %252 = vmatmul.mubr.bf16.gmra.mrb[0].mxu0 %v148
    %v253 = vpop.f32.mrb[0].mxu0
    %v254 = vadd.f32 0.0, %v253
    %v255 = vpop.f32.mrb[0].mxu0
    %v256 = vpop.f32.mrb[0].mxu0
    %v257 = vadd.f32 0.0, %v256
    %v258 = vpop.f32.mrb[0].mxu0
    %259 = vmatprep.mubr.bf16.mxu0 0
    %260 = vmatmul.mubr.bf16.gmra.mrb[0].mxu0 %v149
    %v261 = vpop.f32.mrb[0].mxu0
    %v262 = vadd.f32 0.0, %v261
    %v263 = vpop.f32.mrb[0].mxu0
    %v264 = vpop.f32.mrb[0].mxu0
    %v265 = vadd.f32 0.0, %v264
    %v266 = vpop.f32.mrb[0].mxu0
    %267 = vmatprep.mubr.bf16.mxu0 0
    %268 = vmatmul.mubr.bf16.gmra.mrb[0].mxu0 %v150
    %v269 = vpop.f32.mrb[0].mxu0
    %v270 = vadd.f32 0.0, %v269
    %v271 = vpop.f32.mrb[0].mxu0
    %v272 = vpop.f32.mrb[0].mxu0
    %v273 = vadd.f32 0.0, %v272
    %v274 = vpop.f32.mrb[0].mxu0
    %275 = vmatprep.mubr.bf16.mxu0 0
    %276 = vmatmul.mubr.bf16.gmra.mrb[0].mxu0 %v151
    %v277 = vpop.f32.mrb[0].mxu0
    %v278 = vadd.f32 0.0, %v277
    %v279 = vpop.f32.mrb[0].mxu0
    %v280 = vpop.f32.mrb[0].mxu0
    %v281 = vadd.f32 0.0, %v280
    %v282 = vpop.f32.mrb[0].mxu0
    %283 = vmatprep.mubr.bf16.mxu0 0
    %284 = vmatmul.mubr.bf16.gmra.mrb[0].mxu0 %v152
    %v285 = vpop.f32.mrb[0].mxu0
    %v286 = vadd.f32 0.0, %v285
    %v287 = vpop.f32.mrb[0].mxu0
    %v288 = vpop.f32.mrb[0].mxu0
    %v289 = vadd.f32 0.0, %v288
    %v290 = vpop.f32.mrb[0].mxu0
    %291 = vmatprep.mubr.bf16.mxu0 0
    %292 = vmatmul.mubr.bf16.gmra.mrb[0].mxu0 %v153
    %v293 = vpop.f32.mrb[0].mxu0
    %v294 = vadd.f32 0.0, %v293
    %v295 = vpop.f32.mrb[0].mxu0
    %v296 = vpop.f32.mrb[0].mxu0
    %v297 = vadd.f32 0.0, %v296
    %v298 = vpop.f32.mrb[0].mxu0
    %299 = vmatprep.mubr.bf16.mxu0 0
    %300 = vmatmul.mubr.bf16.gmra.mrb[0].mxu0 %v154
    %v301 = vpop.f32.mrb[0].mxu0
    %v302 = vadd.f32 0.0, %v301
    %v303 = vpop.f32.mrb[0].mxu0
    %v304 = vpop.f32.mrb[0].mxu0
    %v305 = vadd.f32 0.0, %v304
    %v306 = vpop.f32.mrb[0].mxu0
    %307 = vdwg.mxu0
    %v308 = vadd.f32 %v67, %v246
    %v309 = vadd.f32 %v68, %v249
    %v310 = vadd.f32 %v69, %v254
    %v311 = vadd.f32 %v70, %v257
    %v312 = vadd.f32 %v71, %v262
    %v313 = vadd.f32 %v72, %v265
    %v314 = vadd.f32 %v73, %v270
    %v315 = vadd.f32 %v74, %v273
    %v316 = vadd.f32 %v75, %v278
    %v317 = vadd.f32 %v76, %v281
    %v318 = vadd.f32 %v77, %v286
    %v319 = vadd.f32 %v78, %v289
    %v320 = vadd.f32 %v79, %v294
    %v321 = vadd.f32 %v80, %v297
    %v322 = vadd.f32 %v81, %v302
    %v323 = vadd.f32 %v82, %v305
    %324 = vst [vmem:[#allocation2] sm:$0xff] %v308
    %325 = vst [vmem:[#allocation2 + $0x8] sm:$0xff] %v309
    %326 = vst [vmem:[#allocation2 + $0x10] sm:$0xff] %v310
    %327 = vst [vmem:[#allocation2 + $0x18] sm:$0xff] %v311
    %328 = vst [vmem:[#allocation2 + $0x20] sm:$0xff] %v312
    %329 = vst [vmem:[#allocation2 + $0x28] sm:$0xff] %v313
    %330 = vst [vmem:[#allocation2 + $0x30] sm:$0xff] %v314
    %331 = vst [vmem:[#allocation2 + $0x38] sm:$0xff] %v315
    %332 = vst [vmem:[#allocation2 + $0x40] sm:$0xff] %v316
    %333 = vst [vmem:[#allocation2 + $0x48] sm:$0xff] %v317
    %334 = vst [vmem:[#allocation2 + $0x50] sm:$0xff] %v318
    %335 = vst [vmem:[#allocation2 + $0x58] sm:$0xff] %v319
    %336 = vst [vmem:[#allocation2 + $0x60] sm:$0xff] %v320
    %337 = vst [vmem:[#allocation2 + $0x68] sm:$0xff] %v321
    %338 = vst [vmem:[#allocation2 + $0x70] sm:$0xff] %v322
    %339 = vst [vmem:[#allocation2 + $0x78] sm:$0xff] %v323
    // Predicated region
    $region30: #{tpu_custom_call.1} parent=1 // pred_check
      %p340 = pneg %p47
    $region31: #{tpu_custom_call.1} parent=1 // pred_check_branch
      %342 = sbr.rel (%p340) target = $region33
    $region32: #{tpu_custom_call.1} parent=1 // pred_region
      %v343 = vld [vmem:[#allocation2] sm:$0xff]
      %v344 = vld [vmem:[#allocation2 + $0x8] sm:$0xff]
      %v345 = vld [vmem:[#allocation2 + $0x10] sm:$0xff]
      %v346 = vld [vmem:[#allocation2 + $0x18] sm:$0xff]
      %v347 = vld [vmem:[#allocation2 + $0x20] sm:$0xff]
      %v348 = vld [vmem:[#allocation2 + $0x28] sm:$0xff]
      %v349 = vld [vmem:[#allocation2 + $0x30] sm:$0xff]
      %v350 = vld [vmem:[#allocation2 + $0x38] sm:$0xff]
      %v351 = vld [vmem:[#allocation2 + $0x40] sm:$0xff]
      %v352 = vld [vmem:[#allocation2 + $0x48] sm:$0xff]
      %v353 = vld [vmem:[#allocation2 + $0x50] sm:$0xff]
      %v354 = vld [vmem:[#allocation2 + $0x58] sm:$0xff]
      %v355 = vld [vmem:[#allocation2 + $0x60] sm:$0xff]
      %v356 = vld [vmem:[#allocation2 + $0x68] sm:$0xff]
      %v357 = vld [vmem:[#allocation2 + $0x70] sm:$0xff]
      %v358 = vld [vmem:[#allocation2 + $0x78] sm:$0xff]
      %v359 = vld [vmem:[%s2] sm:$0x1]
      %v361 = vlaneseq
      %v362 = vshrl.u32 %v361, 7
      %v363 = vsub.s32 0, %v362
      %v364 = vrot.slane %v359, %v363
      %v366 = vmul.f32 %v343, %v364
      %v367 = vmul.f32 %v344, %v364
      %v368 = vmul.f32 %v345, %v364
      %v369 = vmul.f32 %v346, %v364
      %v370 = vmul.f32 %v347, %v364
      %v371 = vmul.f32 %v348, %v364
      %v372 = vmul.f32 %v349, %v364
      %v373 = vmul.f32 %v350, %v364
      %v374 = vmul.f32 %v351, %v364
      %v375 = vmul.f32 %v352, %v364
      %v376 = vmul.f32 %v353, %v364
      %v377 = vmul.f32 %v354, %v364
      %v378 = vmul.f32 %v355, %v364
      %v379 = vmul.f32 %v356, %v364
      %v380 = vmul.f32 %v357, %v364
      %v381 = vmul.f32 %v358, %v364
      %v382 = vld [vmem:[%s3] sm:$0x1]
      %v384 = vlaneseq
      %v385 = vshrl.u32 %v384, 7
      %v386 = vsub.s32 0, %v385
      %v387 = vrot.slane %v382, %v386
      %v389 = vadd.f32 %v366, %v387
      %v390 = vadd.f32 %v367, %v387
      %v391 = vadd.f32 %v368, %v387
      %v392 = vadd.f32 %v369, %v387
      %v393 = vadd.f32 %v370, %v387
      %v394 = vadd.f32 %v371, %v387
      %v395 = vadd.f32 %v372, %v387
      %v396 = vadd.f32 %v373, %v387
      %v397 = vadd.f32 %v374, %v387
      %v398 = vadd.f32 %v375, %v387
      %v399 = vadd.f32 %v376, %v387
      %v400 = vadd.f32 %v377, %v387
      %v401 = vadd.f32 %v378, %v387
      %v402 = vadd.f32 %v379, %v387
      %v403 = vadd.f32 %v380, %v387
      %v404 = vadd.f32 %v381, %v387
      %v405 = vmax.f32 %v389, 0.0
      %v406 = vmax.f32 %v390, 0.0
      %v407 = vmax.f32 %v391, 0.0
      %v408 = vmax.f32 %v392, 0.0
      %v409 = vmax.f32 %v393, 0.0
      %v410 = vmax.f32 %v394, 0.0
      %v411 = vmax.f32 %v395, 0.0
      %v412 = vmax.f32 %v396, 0.0
      %v413 = vmax.f32 %v397, 0.0
      %v414 = vmax.f32 %v398, 0.0
      %v415 = vmax.f32 %v399, 0.0
      %v416 = vmax.f32 %v400, 0.0
      %v417 = vmax.f32 %v401, 0.0
      %v418 = vmax.f32 %v402, 0.0
      %v419 = vmax.f32 %v403, 0.0
      %v420 = vmax.f32 %v404, 0.0
      %v421 = vpack.c.bf16 %v406, %v405
      %v422 = vpack.c.bf16 %v408, %v407
      %v423 = vpack.c.bf16 %v410, %v409
      %v424 = vpack.c.bf16 %v412, %v411
      %v425 = vpack.c.bf16 %v414, %v413
      %v426 = vpack.c.bf16 %v416, %v415
      %v427 = vpack.c.bf16 %v418, %v417
      %v428 = vpack.c.bf16 %v420, %v419
      %v437 = vunpack.c.l.b16 %v421
      %v438 = vunpack.c.h.b16 %v421
      %v439 = vunpack.c.l.b16 %v422
      %v440 = vunpack.c.h.b16 %v422
      %v441 = vunpack.c.l.b16 %v423
      %v442 = vunpack.c.h.b16 %v423
      %v443 = vunpack.c.l.b16 %v424
      %v444 = vunpack.c.h.b16 %v424
      %v445 = vunpack.c.l.b16 %v425
      %v446 = vunpack.c.h.b16 %v425
      %v447 = vunpack.c.l.b16 %v426
      %v448 = vunpack.c.h.b16 %v426
      %v449 = vunpack.c.l.b16 %v427
      %v450 = vunpack.c.h.b16 %v427
      %v451 = vunpack.c.l.b16 %v428
      %v452 = vunpack.c.h.b16 %v428
      %v453 = vpack.c.b16 %v437, %v437
      %v454 = vpack.c.b16 %v438, %v438
      %v455 = vpack.c.b16 %v439, %v439
      %v456 = vpack.c.b16 %v440, %v440
      %v457 = vpack.c.b16 %v441, %v441
      %v458 = vpack.c.b16 %v442, %v442
      %v459 = vpack.c.b16 %v443, %v443
      %v460 = vpack.c.b16 %v444, %v444
      %v461 = vpack.c.b16 %v445, %v445
      %v462 = vpack.c.b16 %v446, %v446
      %v463 = vpack.c.b16 %v447, %v447
      %v464 = vpack.c.b16 %v448, %v448
      %v465 = vpack.c.b16 %v449, %v449
      %v466 = vpack.c.b16 %v450, %v450
      %v467 = vpack.c.b16 %v451, %v451
      %v468 = vpack.c.b16 %v452, %v452
      %485 = vst [vmem:[#allocation8] sm:$0xf] %v453
      %486 = vst [vmem:[#allocation8 + $0x4] sm:$0xf] %v454
      %487 = vst [vmem:[#allocation8 + $0x8] sm:$0xf] %v455
      %488 = vst [vmem:[#allocation8 + $0xc] sm:$0xf] %v456
      %489 = vst [vmem:[#allocation8 + $0x10] sm:$0xf] %v457
      %490 = vst [vmem:[#allocation8 + $0x14] sm:$0xf] %v458
      %491 = vst [vmem:[#allocation8 + $0x18] sm:$0xf] %v459
      %492 = vst [vmem:[#allocation8 + $0x1c] sm:$0xf] %v460
      %493 = vst [vmem:[#allocation8 + $0x20] sm:$0xf] %v461
      %494 = vst [vmem:[#allocation8 + $0x24] sm:$0xf] %v462
      %495 = vst [vmem:[#allocation8 + $0x28] sm:$0xf] %v463
      %496 = vst [vmem:[#allocation8 + $0x2c] sm:$0xf] %v464
      %497 = vst [vmem:[#allocation8 + $0x30] sm:$0xf] %v465
      %498 = vst [vmem:[#allocation8 + $0x34] sm:$0xf] %v466
      %499 = vst [vmem:[#allocation8 + $0x38] sm:$0xf] %v467
      %500 = vst [vmem:[#allocation8 + $0x3c] sm:$0xf] %v468
    $region33: #{tpu_custom_call.1} parent=1 // pred_fallthru
      _
    // Predicated region
    $region34: #{tpu_custom_call.1} parent=1 // pred_check
      _
    $region35: #{tpu_custom_call.1} parent=1 // pred_check_branch
      %502 = sbr.rel (0) target = $region37
    $region36: #{tpu_custom_call.1} parent=1 // pred_region
      %s504 = ssub.s32 1024, 1024
      %505 = vsyncadd [#allocation5], %s504
      %s506 = sshll.u32 [#allocation8], 4
      %s507 = int_to_ptr.vmem [resolvable:$true] %s506
      %512 = dma.vmem_to_hbm [thread:$0]  %s507, 1024, %s4, [#allocation5], 64, 64, 4
    $region37: #{tpu_custom_call.1} parent=1 // pred_fallthru
      _
    // Predicated region
    $region38: #{tpu_custom_call.1} parent=1 // pred_check
      _
    $region39: #{tpu_custom_call.1} parent=1 // pred_check_branch
      %514 = sbr.rel (0) target = $region41
    $region40: #{tpu_custom_call.1} parent=1 // pred_region
      %515 = dma.done [#allocation5], 1024
    $region41: #{tpu_custom_call.1} parent=1 // pred_fallthru
      _
    %516 = vsyncpa [#allocation4], 1
    %517 = vsyncpa [#allocation7], 1
    %518 = vsyncpa [#allocation5], 1

</llo_original>
